<compile_context>
chip_gen: v7x
topology: tpu7x:2x2x1
jax: 0.10.0
libtpu: 0.0.40
codegen_flags: <defaults>
</compile_context>

<pallas_src>
import functools

import jax
import jax.numpy as jnp
from jax.experimental import pallas as pl
from jax.experimental.pallas import tpu as pltpu


def _prediction_kernel(vis_ref, lan_ref, out_ref, *, compute_dtype):
    # vis_ref: (BB, K, D)   lan_ref: (BB, TY, D)   out_ref: (BB, TY, K) int8
    vis = vis_ref[...]
    lan = lan_ref[...]
    if compute_dtype is not None:
        vis = vis.astype(compute_dtype)
        lan = lan.astype(compute_dtype)

    # sim[b, y, k] = sum_d lan[b, y, d] * vis[b, k, d]
    # Contract on D directly (no explicit transpose); MXU fed directly,
    # accumulate in f32.
    sim = jnp.einsum('byd,bkd->byk', lan, vis,
                     preferred_element_type=jnp.float32)          # (BB, TY, K)

    K = sim.shape[-1]
    # torch.max picks the FIRST maximal index; reproduce that tie-breaking.
    max_val = jnp.max(sim, axis=-1, keepdims=True)                 # (BB, TY, 1)
    k_iota = jax.lax.broadcasted_iota(jnp.int32, sim.shape, 2)     # (BB, TY, K)
    first_idx = jnp.min(jnp.where(sim >= max_val, k_iota, K),
                        axis=-1, keepdims=True)                    # (BB, TY, 1)
    out_ref[...] = (k_iota == first_idx).astype(jnp.int8)


# Conservative per-call VMEM budget for tile sizing: 2 inputs + 1 output, each
# double-buffered by the BlockSpec pipeline, must stay well under the v7x
# scoped default (32 MiB).
_VMEM_TILE_BUDGET_BYTES = 16 * 1024 * 1024


def _divisors_desc(n):
    return [d for d in range(n, 0, -1) if n % d == 0]


def _tile_bytes(bb, ty, K, D, in_itemsize, out_itemsize):
    # x2 for the pipeline's double buffering of every pipelined operand.
    return 2 * bb * (K * D * in_itemsize
                     + ty * D * in_itemsize
                     + ty * K * out_itemsize)


def _pick_tiles(B, Y, K, D, in_itemsize, out_itemsize=1):
    """Pick (batch_block, y_block): biggest tile under the VMEM budget.

    Prefers a full-Y tile (fewer grid steps, lane/sublane friendly); shrinks
    the batch block first, then the Y block (multiples of 8 to satisfy the
    (8, 128) sublane constraint on non-full blocks).
    """
    y_cands = [Y] + [d for d in _divisors_desc(Y) if d != Y and d % 8 == 0]
    for ty in y_cands:
        for bb in _divisors_desc(B):
            if B >= 2 and bb == B:
                # Keep >= 2 grid steps so v7x's two TensorCores both get work.
                continue
            if _tile_bytes(bb, ty, K, D, in_itemsize, out_itemsize) \
                    <= _VMEM_TILE_BUDGET_BYTES:
                return bb, ty
    # Fallback: minimal legal tile; let the compiler's VMEM limit decide.
    return 1, (8 if (Y % 8 == 0 and Y > 8) else Y)


def weak_res_head_predict(vis_fs, lan_fs, *, compute_dtype=None,
                          block_batch=None, block_y=None):
    """Eval-mode forward of WeakREShead (== get_prediction)."""
    B, K, D = vis_fs.shape
    Bl, Y, Dl = lan_fs.shape
    assert B == Bl and D == Dl

    in_itemsize = jnp.dtype(vis_fs.dtype).itemsize
    auto_bb, auto_ty = _pick_tiles(B, Y, K, D, in_itemsize, 1)
    bb = block_batch if block_batch is not None else auto_bb
    ty = block_y if block_y is not None else auto_ty
    assert B % bb == 0 and Y % ty == 0

    # Y is the inner (fastest-varying) grid axis: the vis block index is then
    # constant across consecutive steps, so its DMA is skipped by the pipeline.
    grid = (B // bb, Y // ty)

    kernel = functools.partial(_prediction_kernel, compute_dtype=compute_dtype)

    flops = 2 * B * Y * K * D
    bytes_accessed = (B * K * D + B * Y * D) * in_itemsize + B * Y * K  # i8 out

    out_i8 = pl.pallas_call(
        kernel,
        out_shape=jax.ShapeDtypeStruct((B, Y, K), jnp.int8),
        grid=grid,
        in_specs=[
            pl.BlockSpec((bb, K, D), lambda b, y: (b, 0, 0)),   # vis
            pl.BlockSpec((bb, ty, D), lambda b, y: (b, y, 0)),  # lan
        ],
        out_specs=pl.BlockSpec((bb, ty, K), lambda b, y: (b, y, 0)),
        compiler_params=pltpu.CompilerParams(
            dimension_semantics=("parallel", "parallel"),
            vmem_limit_bytes=32 * 1024 * 1024,
        ),
        cost_estimate=pl.CostEstimate(
            flops=flops, transcendentals=0, bytes_accessed=bytes_accessed),
    )(vis_fs, lan_fs)

    # int8 one-hot -> bool: cheap 1-byte-per-element cast.
    return out_i8.astype(bool)


class WeakRESheadPallas:
    """Minimal stand-in for the nn.Module; eval-mode forward only."""

    def __init__(self, each_select=4):
        self.each_select = each_select  # only used by the training branch

    def __call__(self, vis_fs, lan_fs):
        return weak_res_head_predict(vis_fs, lan_fs)


def _reference_predict(vis_fs, lan_fs):
    # Pure-JAX reference mirroring the PyTorch get_prediction (f32).
    sim = jnp.einsum('bkd,byd->byk', vis_fs, lan_fs,
                     preferred_element_type=jnp.float32)
    idx = jnp.argmax(sim, axis=2, keepdims=True)
    k_iota = jax.lax.broadcasted_iota(jnp.int32, sim.shape, 2)
    return k_iota == idx


if __name__ == "__main__":
    key = jax.random.PRNGKey(0)
    k_vis, k_lan = jax.random.split(key)

    B, K, D = 2, 16, 32   # batch, visual queries, feature dim
    Y = 8                 # language queries

    vis_fs = jax.random.normal(k_vis, (B, K, D), dtype=jnp.float32)
    lan_fs = jax.random.normal(k_lan, (B, Y, D), dtype=jnp.float32)

    head = WeakRESheadPallas(each_select=4)
    preds = jax.block_until_ready(head(vis_fs, lan_fs))

    ref = _reference_predict(vis_fs, lan_fs)
    assert preds.shape == (B, Y, K) and preds.dtype == jnp.bool_
    assert bool(jnp.array_equal(preds, ref))

    # bf16-compute variant (v6e/v7x MXU fast path) — exercise compile/run.
    preds_bf16 = jax.block_until_ready(
        weak_res_head_predict(vis_fs, lan_fs, compute_dtype=jnp.bfloat16))
    assert preds_bf16.shape == (B, Y, K) and preds_bf16.dtype == jnp.bool_

    print("KERNEL_OK")
</pallas_src>

<mosaic_0001>
module attributes {stable_mosaic.version = 11 : i64} {
  func.func @_prediction_kernel(%arg0: i32, %arg1: i32, %arg2: memref<1x16x32xf32, #tpu.memory_space<vmem>>, %arg3: memref<1x8x32xf32, #tpu.memory_space<vmem>>, %arg4: memref<1x8x16xi8, #tpu.memory_space<vmem>>) attributes {dimension_semantics = [#tpu.dimension_semantics<parallel>, #tpu.dimension_semantics<parallel>], iteration_bounds = array<i64: 2, 1>, scalar_prefetch = 0 : i64, scratch_operands = 0 : i64, tpu.core_type = #tpu.core_type<tc>, window_params = [{transform_indices = @transform_0, window_bounds = array<i64: 1, 16, 32>}, {transform_indices = @transform_1, window_bounds = array<i64: 1, 8, 32>}, {transform_indices = @transform_2, window_bounds = array<i64: 1, 8, 16>}]} {
    %c0 = arith.constant 0 : index
    %c0_0 = arith.constant 0 : index
    %c0_1 = arith.constant 0 : index
    %0 = vector.load %arg2[%c0, %c0_0, %c0_1] : memref<1x16x32xf32, #tpu.memory_space<vmem>>, vector<1x16x32xf32>
    %c0_2 = arith.constant 0 : index
    %c0_3 = arith.constant 0 : index
    %c0_4 = arith.constant 0 : index
    %1 = vector.load %arg3[%c0_2, %c0_3, %c0_4] : memref<1x8x32xf32, #tpu.memory_space<vmem>>, vector<1x8x32xf32>
    "tpu.trace_start"() <{level = 10 : i32, message = "byd,bkd->byk"}> : () -> ()
    %cst = arith.constant dense<0.000000e+00> : vector<1x8x16xf32>
    %2 = tpu.matmul %1, %0, %cst {dimension_numbers = #tpu.dot_dimension_numbers<[2], [2], [1], [1], [0, 0, 0, 1, 1, 1], [0], [0]>} : vector<1x8x32xf32>, vector<1x16x32xf32>, vector<1x8x16xf32> -> vector<1x8x16xf32>
    "tpu.trace_stop"() : () -> ()
    %cst_5 = arith.constant dense<0xFF800000> : vector<1x8xf32>
    %3 = vector.multi_reduction <maximumf>, %2, %cst_5 [2] : vector<1x8x16xf32> to vector<1x8xf32>
    %4 = vector.shape_cast %3 : vector<1x8xf32> to vector<1x8x1xf32>
    %5 = tpu.iota {dimensions = array<i32: 2>} : vector<1x8x16xi32>
    %6 = vector.broadcast %4 : vector<1x8x1xf32> to vector<1x8x16xf32>
    %7 = arith.cmpf oge, %2, %6 : vector<1x8x16xf32>
    %c16_i32 = arith.constant 16 : i32
    %8 = vector.broadcast %c16_i32 : i32 to vector<1x8x16xi32>
    %9 = arith.select %7, %5, %8 : vector<1x8x16xi1>, vector<1x8x16xi32>
    %cst_6 = arith.constant dense<2147483647> : vector<1x8xi32>
    %10 = vector.multi_reduction <minsi>, %9, %cst_6 [2] : vector<1x8x16xi32> to vector<1x8xi32>
    %11 = vector.shape_cast %10 : vector<1x8xi32> to vector<1x8x1xi32>
    %12 = vector.broadcast %11 : vector<1x8x1xi32> to vector<1x8x16xi32>
    %13 = arith.cmpi eq, %5, %12 : vector<1x8x16xi32>
    %14 = arith.extui %13 : vector<1x8x16xi1> to vector<1x8x16xi8>
    %c0_7 = arith.constant 0 : index
    %c0_8 = arith.constant 0 : index
    %c0_9 = arith.constant 0 : index
    %15 = vector.load %arg4[%c0_7, %c0_8, %c0_9] : memref<1x8x16xi8, #tpu.memory_space<vmem>>, vector<1x8x16xi8>
    tpu.vector_store %arg4[%c0_7, %c0_8, %c0_9], %14 {strides = array<i32>} : memref<1x8x16xi8, #tpu.memory_space<vmem>>, vector<1x8x16xi8>,
    return
  }
  func.func @transform_0(%arg0: i32, %arg1: i32) -> (i32, i32, i32) {
    %c0_i32 = arith.constant 0 : i32
    %c0_i32_0 = arith.constant 0 : i32
    %c0_i32_1 = arith.constant 0 : i32
    return %arg0, %c0_i32, %c0_i32_0 : i32, i32, i32
  }
  func.func @transform_1(%arg0: i32, %arg1: i32) -> (i32, i32, i32) {
    %c0_i32 = arith.constant 0 : i32
    %c0_i32_0 = arith.constant 0 : i32
    return %arg0, %arg1, %c0_i32 : i32, i32, i32
  }
  func.func @transform_2(%arg0: i32, %arg1: i32) -> (i32, i32, i32) {
    %c0_i32 = arith.constant 0 : i32
    %c0_i32_0 = arith.constant 0 : i32
    return %arg0, %arg1, %c0_i32 : i32, i32, i32
  }
}

</mosaic_0001>

<llo_original>
// kernel: tpu_custom_call.1
$region0: #{tpu_custom_call.1}
  #allocation0 [shape = 'u32[]', space=smem, size = 0x4, offset = 0x4, fixed_abs, tag = 'smem constant byte address 0x4 - core index']
  #allocation1 [shape = 'u32[144,128]{1,0:T(1,128)}', space=vmem, size = 0x12000, scoped, tag = 'internal scratch']
  %s0 = inlined_call_operand.hbm [shape: f32[2,16,32], index: 0, kind: input, shape index: {}]
  %s1 = inlined_call_operand.hbm [shape: f32[2,8,32], index: 1, kind: input, shape index: {}]
  %s2 = inlined_call_operand.hbm [shape: s8[2,8,16], index: 2, kind: output, shape index: {}]
  %s3 = sld [smem:[#allocation0]]
  $region49: #{tpu_custom_call.1} parent=0
    _
  %s5 = ssub.s32 1, %s3
  %s6 = scalar_select 0, %s5, %s3
  $region1: #{tpu_custom_call.1} parent=0
    #allocation2 [shape = 'u8[16384]{0}', space=vmem, size = 0x4000, scoped, tag = 'input window, operand 0']
    #allocation3 [shape = 's32[2]{0}', space=sflag, size = 0x8, scoped, tag = 'scoped memory for tpu_custom_call.1']
    #allocation4 [shape = 's32[2]{0}', space=sflag, size = 0x8, scoped, tag = 'scoped memory for tpu_custom_call.1']
    #allocation5 [shape = 'u8[8192]{0}', space=vmem, size = 0x2000, scoped, tag = 'input window, operand 1']
    #allocation6 [shape = 's32[2]{0}', space=sflag, size = 0x8, scoped, tag = 'scoped memory for tpu_custom_call.1']
    #allocation7 [shape = 'u8[2048]{0}', space=vmem, size = 0x800, scoped, tag = 'output window, operand 0']
    %7 = vsyncpa [#allocation3], 0
    %s8 = scalar_lea.sflag [#allocation3], 1
    %9 = vsyncpa %s8, 0
    %10 = vsyncpa [#allocation6], 0
    %s11 = scalar_lea.sflag [#allocation6], 1
    %12 = vsyncpa %s11, 0
    %13 = vsyncpa [#allocation4], 0
    %s14 = scalar_lea.sflag [#allocation4], 1
    %15 = vsyncpa %s14, 0
    loop: start=0, step=1, limit=4
    $region2: #{tpu_custom_call.1} parent=1 // loop_pre_header
      _
    $region3: #{tpu_custom_call.1} parent=1 // loop_header
      %s17 = sphi 0, %s21
      %p18 = scmp.ge.s32.totalorder %s17, 4
      %s24 = sphi 0, %s36
      %s25 = sphi 0, %s32
      %s26 = sphi 0, %s24
      %s27 = sphi 0, %s25
      %s28 = sphi 0, %s26
      %s29 = sphi 0, %s27
      %s39 = sphi 0, %s41
      %s42 = sphi 0, %s39
      %s43 = sphi 0, %s42
      %s59 = sphi 0, %s43
      %s67 = sphi 0, %s69
      %s70 = sphi 0, %s67
      %s71 = sphi 0, %s70
      %s87 = sphi 0, %s71
      %s95 = sphi 0, %s97
      %s98 = sphi 0, %s95
      %s99 = sphi 0, %s98
      %s115 = sphi 0, %s99
    $region4: #{tpu_custom_call.1} parent=1 // loop_header_branch
      %20 = sbr.rel (%p18) target = $region8
    $region5: #{tpu_custom_call.1} parent=1 // loop_body
      %s22 = ssub.s32 %s17, 1
      %s23 = ssub.s32 %s17, 2
      %s30 = sadd.s32 1, %s25
      %p31 = scmp.ge.s32.totalorder %s30, 1
      %s32 = scalar_select %p31, 0, %s30
      %s33 = sadd.s32 1, %s24
      %s34 = scalar_select %p31, %s33, %s24
      %p35 = scmp.ge.s32.totalorder %s34, 2
      %s36 = scalar_select %p35, 0, %s34
      %s37 = ssub.s32 %s24, %s36
      %p38 = scmp.eq.s32.totalorder %s37, 0
      %s40 = sadd.s32 %s39, 1
      %s41 = scalar_select %p38, %s39, %s40
      %p44 = pneg %p38
      %p45 = scmp.eq.s32.totalorder %s17, 1
      %p46 = por %p44, %p45
      %p47 = scmp.ne.s32.totalorder %s39, %s42
      %p48 = scmp.eq.s32.totalorder %s17, 0
      %p49 = por %p47, %p48
      %p50 = scmp.ne.s32.totalorder %s39, %s42
      %p51 = scmp.eq.s32.totalorder %s22, 1
      %p52 = por %p50, %p51
      %p53 = scmp.ne.s32.totalorder %s42, %s43
      %p54 = scmp.eq.s32.totalorder %s22, 0
      %p55 = por %p53, %p54
      %p56 = scmp.ne.s32.totalorder %s42, %s43
      %p57 = scmp.eq.s32.totalorder %s23, 1
      %p58 = por %p56, %p57
      %p60 = scmp.ne.s32.totalorder %s43, %s59
      %p61 = scmp.eq.s32.totalorder %s23, 0
      %p62 = por %p60, %p61
      %s63 = ssub.s32 %s24, %s36
      %s64 = ssub.s32 %s25, %s32
      %s65 = sor.u32 %s63, %s64
      %p66 = scmp.eq.s32.totalorder %s65, 0
      %s68 = sadd.s32 %s67, 1
      %s69 = scalar_select %p66, %s67, %s68
      %p72 = pneg %p66
      %p73 = scmp.eq.s32.totalorder %s17, 1
      %p74 = por %p72, %p73
      %p75 = scmp.ne.s32.totalorder %s67, %s70
      %p76 = scmp.eq.s32.totalorder %s17, 0
      %p77 = por %p75, %p76
      %p78 = scmp.ne.s32.totalorder %s67, %s70
      %p79 = scmp.eq.s32.totalorder %s22, 1
      %p80 = por %p78, %p79
      %p81 = scmp.ne.s32.totalorder %s70, %s71
      %p82 = scmp.eq.s32.totalorder %s22, 0
      %p83 = por %p81, %p82
      %p84 = scmp.ne.s32.totalorder %s70, %s71
      %p85 = scmp.eq.s32.totalorder %s23, 1
      %p86 = por %p84, %p85
      %p88 = scmp.ne.s32.totalorder %s71, %s87
      %p89 = scmp.eq.s32.totalorder %s23, 0
      %p90 = por %p88, %p89
      %s91 = ssub.s32 %s24, %s36
      %s92 = ssub.s32 %s25, %s32
      %s93 = sor.u32 %s91, %s92
      %p94 = scmp.eq.s32.totalorder %s93, 0
      %s96 = sadd.s32 %s95, 1
      %s97 = scalar_select %p94, %s95, %s96
      %p100 = pneg %p94
      %p101 = scmp.eq.s32.totalorder %s17, 1
      %p102 = por %p100, %p101
      %p103 = scmp.ne.s32.totalorder %s95, %s98
      %p104 = scmp.eq.s32.totalorder %s17, 0
      %p105 = por %p103, %p104
      %p106 = scmp.ne.s32.totalorder %s95, %s98
      %p107 = scmp.eq.s32.totalorder %s22, 1
      %p108 = por %p106, %p107
      %p109 = scmp.ne.s32.totalorder %s98, %s99
      %p110 = scmp.eq.s32.totalorder %s22, 0
      %p111 = por %p109, %p110
      %p112 = scmp.ne.s32.totalorder %s98, %s99
      %p113 = scmp.eq.s32.totalorder %s23, 1
      %p114 = por %p112, %p113
      %p116 = scmp.ne.s32.totalorder %s99, %s115
      %p117 = scmp.eq.s32.totalorder %s23, 0
      %p118 = por %p116, %p117
      %p119 = scmp.le.s32.totalorder 1, %s17
      %p120 = scmp.lt.s32.totalorder %s17, 3
      %p121 = pnand %p119, %p120
      %p122 = pneg %p121
      // Predicated region
      $region9: #{tpu_custom_call.1} parent=5 // pred_check
        _
      $region10: #{tpu_custom_call.1} parent=5 // pred_check_branch
        %124 = sbr.rel (%p121) target = $region12
      $region11: #{tpu_custom_call.1} parent=5 // pred_region
        %s125 = ssub.s32 %s17, 1
      $region12: #{tpu_custom_call.1} parent=5 // pred_fallthru
        _
      %p126 = scmp.lt.s32.totalorder %s17, 2
      // Predicated region
      $region13: #{tpu_custom_call.1} parent=5 // pred_check
        %p127 = pneg %p126
      $region14: #{tpu_custom_call.1} parent=5 // pred_check_branch
        %129 = sbr.rel (%p127) target = $region16
      $region15: #{tpu_custom_call.1} parent=5 // pred_region
        // Predicated region
        $region17: #{tpu_custom_call.1} parent=15 // pred_check
          %p130 = pneg %p49
        $region18: #{tpu_custom_call.1} parent=15 // pred_check_branch
          %132 = sbr.rel (%p130) target = $region20
        $region19: #{tpu_custom_call.1} parent=15 // pred_region
          %s133 = sand.u32 %s39, 1
          %s134 = scalar_lea.sflag [#allocation3], %s133
          %s135 = sand.u32 %s39, 1
          %s136 = smul.addr %s135, 16
          %s137 = scalar_lea.vmem [#allocation2], %s136
          %s139 = ssub.s32 256, 256
          %140 = vsyncadd %s134, %s139
          %s141 = smul.addr %s24, 2
          %s142 = smul.addr %s141, 128
          %s143 = scalar_lea.hbm %s0, %s142
          %s144 = sshll.u32 %s137, 4
          %s145 = int_to_ptr.vmem [resolvable:$true] %s144
          %150 = dma.hbm_to_vmem [thread:$0]  %s143, 256, %s145, %s134, 128, 128, 8
        $region20: #{tpu_custom_call.1} parent=15 // pred_fallthru
          _
        // Predicated region
        $region21: #{tpu_custom_call.1} parent=15 // pred_check
          %p151 = pneg %p77
        $region22: #{tpu_custom_call.1} parent=15 // pred_check_branch
          %153 = sbr.rel (%p151) target = $region24
        $region23: #{tpu_custom_call.1} parent=15 // pred_region
          %s154 = sand.u32 %s67, 1
          %s155 = scalar_lea.sflag [#allocation6], %s154
          %s156 = sand.u32 %s67, 1
          %s157 = smul.addr %s156, 8
          %s158 = scalar_lea.vmem [#allocation5], %s157
          %s160 = ssub.s32 128, 128
          %161 = vsyncadd %s155, %s160
          %s162 = sadd.s32 %s25, %s24
          %s163 = smul.addr %s162, 128
          %s164 = scalar_lea.hbm %s1, %s163
          %s166 = sshll.u32 %s158, 4
          %s167 = int_to_ptr.vmem [resolvable:$true] %s166
          %169 = dma.hbm_to_vmem [thread:$0]  %s164, 128, %s167, %s155
        $region24: #{tpu_custom_call.1} parent=15 // pred_fallthru
          _
      $region16: #{tpu_custom_call.1} parent=5 // pred_fallthru
        _
      %p170 = scmp.le.s32.totalorder 1, %s17
      %p171 = scmp.lt.s32.totalorder %s17, 3
      %p172 = pnand %p170, %p171
      %p173 = pneg %p172
      // Predicated region
      $region25: #{tpu_custom_call.1} parent=5 // pred_check
        _
      $region26: #{tpu_custom_call.1} parent=5 // pred_check_branch
        %175 = sbr.rel (%p172) target = $region28
      $region27: #{tpu_custom_call.1} parent=5 // pred_region
        %s176 = ssub.s32 %s17, 1
        %s177 = sand.u32 %s42, 1
        %s178 = scalar_lea.sflag [#allocation3], %s177
        %s179 = sand.u32 %s42, 1
        %s180 = smul.addr %s179, 16
        %s181 = scalar_lea.vmem [#allocation2], %s180
        // Predicated region
        $region29: #{tpu_custom_call.1} parent=27 // pred_check
          %p182 = pneg %p55
        $region30: #{tpu_custom_call.1} parent=27 // pred_check_branch
          %184 = sbr.rel (%p182) target = $region32
        $region31: #{tpu_custom_call.1} parent=27 // pred_region
          %185 = dma.done %s178, 256
        $region32: #{tpu_custom_call.1} parent=27 // pred_fallthru
          _
        %s186 = sand.u32 %s70, 1
        %s187 = scalar_lea.sflag [#allocation6], %s186
        %s188 = sand.u32 %s70, 1
        %s189 = smul.addr %s188, 8
        %s190 = scalar_lea.vmem [#allocation5], %s189
        // Predicated region
        $region33: #{tpu_custom_call.1} parent=27 // pred_check
          %p191 = pneg %p83
        $region34: #{tpu_custom_call.1} parent=27 // pred_check_branch
          %193 = sbr.rel (%p191) target = $region36
        $region35: #{tpu_custom_call.1} parent=27 // pred_region
          %194 = dma.done %s187, 128
        $region36: #{tpu_custom_call.1} parent=27 // pred_fallthru
          _
        %s195 = sand.u32 %s42, 1
        %s196 = scalar_lea.sflag [#allocation3], %s195
        %s197 = sand.u32 %s42, 1
        %s198 = smul.addr %s197, 16
        %s199 = scalar_lea.vmem [#allocation2], %s198
        %p200 = pneg %p55
        %p201 = pneg %p52
        %s202 = sand.u32 %s70, 1
        %s203 = scalar_lea.sflag [#allocation6], %s202
        %s204 = sand.u32 %s70, 1
        %s205 = smul.addr %s204, 8
        %s206 = scalar_lea.vmem [#allocation5], %s205
        %p207 = pneg %p83
        %p208 = pneg %p80
        %p209 = pneg %p111
        %p210 = pneg %p108
        %s211 = sand.u32 %s98, 1
        %s212 = scalar_lea.sflag [#allocation4], %s211
        %s213 = sand.u32 %s98, 1
        %s214 = smul.addr %s213, 2
        %s215 = scalar_lea.vmem [#allocation7], %s214
        %v218 = vld [vmem:[%s181] sm:$0xff]
        %v219 = vld [vmem:[%s181 + $0x8] sm:$0xff]
        %v220 = vld [vmem:[%s190] sm:$0xff]
        %vm221 = vcmask 261120
        %v223 = vsel %vm221, %v220, 0
        %v226 = vsel %vm221, %v218, 0
        %v229 = vsel %vm221, %v219, 0
        %231 = vmatprep.subr.mxu0 0.0
        %232 = vmatpush1.xpose.msra.mxu0 %v226
        %233 = vmatprep.subr.mxu0 0.0
        %234 = vmatpush1.xpose.msra.mxu0 %v229
        %235 = vmatprep.subr.mxu0 0.0
        %236 = vmatpush1.xpose.msra.mxu0 0.0
        %237 = vmatprep.subr.mxu0 0.0
        %238 = vmatpush1.xpose.msra.mxu0 0.0
        %239 = vmatprep.subr.mxu0 0.0
        %240 = vmatpush1.xpose.msra.mxu0 0.0
        %241 = vmatprep.subr.mxu0 0.0
        %242 = vmatpush1.xpose.msra.mxu0 0.0
        %243 = vmatprep.subr.mxu0 0.0
        %244 = vmatpush1.xpose.msra.mxu0 0.0
        %245 = vmatprep.subr.mxu0 0.0
        %246 = vmatpush1.xpose.msra.mxu0 0.0
        %247 = vmatprep.subr.mxu0 0.0
        %248 = vmatpush1.xpose.msra.mxu0 0.0
        %249 = vmatprep.subr.mxu0 0.0
        %250 = vmatpush1.xpose.msra.mxu0 0.0
        %251 = vmatprep.subr.mxu0 0.0
        %252 = vmatpush1.xpose.msra.mxu0 0.0
        %253 = vmatprep.subr.mxu0 0.0
        %254 = vmatpush1.xpose.msra.mxu0 0.0
        %255 = vmatprep.subr.mxu0 0.0
        %256 = vmatpush1.xpose.msra.mxu0 0.0
        %257 = vmatprep.subr.mxu0 0.0
        %258 = vmatpush1.xpose.msra.mxu0 0.0
        %259 = vmatprep.subr.mxu0 0.0
        %260 = vmatpush1.xpose.msra.mxu0 0.0
        %261 = vmatprep.subr.mxu0 0.0
        %262 = vmatpush1.xpose.msra.mxu0 0.0
        %263 = vmatprep.subr.mxu0 0.0
        %264 = vmatpush1.xpose.msra.mxu0 0.0
        %265 = vmatprep.subr.mxu0 0.0
        %266 = vmatpush1.xpose.msra.mxu0 0.0
        %267 = vmatprep.subr.mxu0 0.0
        %268 = vmatpush1.xpose.msra.mxu0 0.0
        %269 = vmatprep.subr.mxu0 0.0
        %270 = vmatpush1.xpose.msra.mxu0 0.0
        %271 = vmatprep.subr.mxu0 0.0
        %272 = vmatpush1.xpose.msra.mxu0 0.0
        %273 = vmatprep.subr.mxu0 0.0
        %274 = vmatpush1.xpose.msra.mxu0 0.0
        %275 = vmatprep.subr.mxu0 0.0
        %276 = vmatpush1.xpose.msra.mxu0 0.0
        %277 = vmatprep.subr.mxu0 0.0
        %278 = vmatpush1.xpose.msra.mxu0 0.0
        %279 = vmatprep.subr.mxu0 0.0
        %280 = vmatpush1.xpose.msra.mxu0 0.0
        %281 = vmatprep.subr.mxu0 0.0
        %282 = vmatpush1.xpose.msra.mxu0 0.0
        %283 = vmatprep.subr.mxu0 0.0
        %284 = vmatpush1.xpose.msra.mxu0 0.0
        %285 = vmatprep.subr.mxu0 0.0
        %286 = vmatpush1.xpose.msra.mxu0 0.0
        %287 = vmatprep.subr.mxu0 0.0
        %288 = vmatpush1.xpose.msra.mxu0 0.0
        %289 = vmatprep.subr.mxu0 0.0
        %290 = vmatpush1.xpose.msra.mxu0 0.0
        %291 = vmatprep.subr.mxu0 0.0
        %292 = vmatpush1.xpose.msra.mxu0 0.0
        %293 = vmatprep.subr.mxu0 0.0
        %294 = vmatpush1.xpose.msra.mxu0 0.0
        %295 = vmatprep.mubr.f32.mxu0 0.0
        %296 = vmatmul.mubr.f32.gmra.mrb[0].mxu0 %v223
        %v297 = vpop.f32.mrb[0].mxu0
        %v298 = vadd.f32 0.0, %v297
        %v299 = vpop.f32.mrb[0].mxu0
        %300 = vdwg.mxu0
        %vm301 = vcmask 130048
        %v302 = vsel %vm301, %v298, -inf
        %303 = vmax.xlane.f32.xlu0 %v302
        %v304 = vpop.xlane.xlu0 %303
        %v305 = vlaneseq
        %v306 = vand.u32 %v305, 127
        %vm307 = vcmp.ge.f32.partialorder %v298, %v304
        %v308 = vsel %vm307, %v306, 16
        %v309 = vsel %vm301, %v308, 2147483647
        %v310 = vand.u32 %v309, 65535
        %v311 = vshra.s32 %v309, 16
        %v312 = vcvt.s32.f32 %v310
        %v313 = vcvt.s32.f32 %v311
        %314 = vmin.xlane.f32.xlu0 %v313
        %v315 = vpop.xlane.xlu0 %314
        %vm316 = vcmp.eq.f32.partialorder %v313, %v315
        %v317 = vsel %vm316, %v312, inf
        %318 = vmin.xlane.f32.xlu0 %v317
        %v319 = vpop.xlane.xlu0 %318
        %v320 = vcvt.f32.s32 %v319
        %v321 = vcvt.f32.s32 %v315
        %v322 = vshll.u32 %v321, 16
        %v323 = vadd.s32 %v322, %v320
        %vm324 = vcmp.eq.s32.totalorder %v306, %v323
        %vm325 = vmpackc.low %vm324, %vm324
        %vm326 = vmpackc.even %vm325, %vm325
        %v327 = vsel %vm326, 16843009, 0
        %vm328 = vcmask 123904
        %329 = vst.msk [vmem:[%s215] sm:$0x3] %vm328, %v327
        %s330 = sand.u32 %s98, 1
        %s331 = scalar_lea.sflag [#allocation4], %s330
        %s332 = sand.u32 %s98, 1
        %s333 = smul.addr %s332, 2
        %s334 = scalar_lea.vmem [#allocation7], %s333
        // Predicated region
        $region37: #{tpu_custom_call.1} parent=27 // pred_check
          %p335 = pneg %p108
        $region38: #{tpu_custom_call.1} parent=27 // pred_check_branch
          %337 = sbr.rel (%p335) target = $region40
        $region39: #{tpu_custom_call.1} parent=27 // pred_region
          %s339 = ssub.s32 32, 32
          %340 = vsyncadd %s331, %s339
          %s341 = sadd.s32 %s27, %s26
          %s342 = smul.addr %s341, 32
          %s343 = scalar_lea.hbm %s2, %s342
          %s345 = sshll.u32 %s334, 4
          %s346 = int_to_ptr.vmem [resolvable:$true] %s345
          %348 = dma.vmem_to_hbm [thread:$0]  %s346, 32, %s343, %s331
        $region40: #{tpu_custom_call.1} parent=27 // pred_fallthru
          _
      $region28: #{tpu_custom_call.1} parent=5 // pred_fallthru
        _
      %p349 = scmp.le.s32.totalorder 2, %s17
      // Predicated region
      $region41: #{tpu_custom_call.1} parent=5 // pred_check
        %p350 = pneg %p349
      $region42: #{tpu_custom_call.1} parent=5 // pred_check_branch
        %352 = sbr.rel (%p350) target = $region44
      $region43: #{tpu_custom_call.1} parent=5 // pred_region
        %s353 = ssub.s32 %s17, 2
        // Predicated region
        $region45: #{tpu_custom_call.1} parent=43 // pred_check
          %p354 = pneg %p114
        $region46: #{tpu_custom_call.1} parent=43 // pred_check_branch
          %356 = sbr.rel (%p354) target = $region48
        $region47: #{tpu_custom_call.1} parent=43 // pred_region
          %s357 = sand.u32 %s99, 1
          %s358 = scalar_lea.sflag [#allocation4], %s357
          %s359 = sand.u32 %s99, 1
          %s360 = smul.addr %s359, 2
          %s361 = scalar_lea.vmem [#allocation7], %s360
          %362 = dma.done %s358, 32
        $region48: #{tpu_custom_call.1} parent=43 // pred_fallthru
          _
      $region44: #{tpu_custom_call.1} parent=5 // pred_fallthru
        _
    $region6: #{tpu_custom_call.1} parent=1 // loop_footer
      %s21 = sadd.s32 1, %s17
    $region7: #{tpu_custom_call.1} parent=1 // loop_footer_branch
      %16 = sbr.rel target = $region3
    $region8: #{tpu_custom_call.1} parent=1 // loop_exit
      _
    %363 = vsyncpa [#allocation3], 1
    %s364 = scalar_lea.sflag [#allocation3], 1
    %365 = vsyncpa %s364, 1
    %366 = vsyncpa [#allocation6], 1
    %s367 = scalar_lea.sflag [#allocation6], 1
    %368 = vsyncpa %s367, 1
    %369 = vsyncpa [#allocation4], 1
    %s370 = scalar_lea.sflag [#allocation4], 1
    %371 = vsyncpa %s370, 1

</llo_original>
